<compile_context>
chip_gen: v6e
topology: v6e:2x2x1
jax: 0.10.0
libtpu: 0.0.40
codegen_flags: <defaults>
</compile_context>

<pallas_src>
import functools

import jax
import jax.numpy as jnp
from jax.experimental import pallas as pl
from jax.experimental.pallas import tpu as pltpu


def _ensemble_kernel(w_ref, b_ref, x_ref, o_ref, *, c_in, c_out):
    """One (batch, pixel-tile) block of the folded ensemble head.

    Layout is NC(HW): pixels map to lanes, channels to sublanes, so output
    stores are lane-dense regardless of C_out.

    w_ref: SMEM (c_in*c_out,)   ensemble-averaged 1x1-conv weights (flattened)
    b_ref: SMEM (c_out,)        ensemble-averaged bias
    x_ref: VMEM (1, c_in, TP)   input pixel tile
    o_ref: VMEM (1, c_out, TP)  output pixel tile
    """
    x = x_ref[0].astype(jnp.float32)                       # (c_in, TP)
    rows = []
    for co in range(c_out):                                # tiny, static -> unrolled
        acc = x[0:1, :] * w_ref[0 * c_out + co]            # VPU scalar*vector FMAs
        for c in range(1, c_in):
            acc = acc + x[c:c + 1, :] * w_ref[c * c_out + co]
        rows.append(acc + b_ref[co])
    out = rows[0] if c_out == 1 else jnp.concatenate(rows, axis=0)
    o_ref[0] = out.astype(o_ref.dtype)


def ensemble_forward(x_nchw, weights, biases, *, max_tile_p=2048):
    """Ensemble of M 1x1 convs, averaged.  x_nchw: (N, C_in, H, W) -> (N, C_out, H, W).

    The average of linear members is itself linear, so the ensemble is folded
    into a single averaged weight/bias in the wrapper (12 floats here); the
    kernel then makes one bandwidth-bound pass over x in its native NCHW
    layout with pixels on the lane axis.
    """
    n, c_in, h, w = x_nchw.shape
    m, c_in_w, c_out = weights.shape
    assert c_in == c_in_w and biases.shape == (m, c_out)

    # Fold the ensemble: mean over M linear layers == one linear layer.
    w_avg = jnp.mean(weights.astype(jnp.float32), axis=0).reshape(-1)  # (C_in*C_out,)
    b_avg = jnp.mean(biases.astype(jnp.float32), axis=0)               # (C_out,)

    # NCHW -> (N, C_in, P): contiguous reshape, no transpose / HBM copy.
    p = h * w
    x3 = x_nchw.reshape(n, c_in, p)

    # Lane-dense pixel tile: multiple of 128, as large as reasonable.
    lane = 128
    tile_p = min(max_tile_p, pl.cdiv(p, lane) * lane)
    p_pad = pl.cdiv(p, tile_p) * tile_p
    if p_pad != p:  # only for ragged spatial sizes; avoided when 128 | H*W
        x3 = jnp.pad(x3, ((0, 0), (0, 0), (0, p_pad - p)))

    grid = (n, p_pad // tile_p)
    out3 = pl.pallas_call(
        functools.partial(_ensemble_kernel, c_in=c_in, c_out=c_out),
        out_shape=jax.ShapeDtypeStruct((n, c_out, p_pad), x_nchw.dtype),
        grid_spec=pltpu.PrefetchScalarGridSpec(
            num_scalar_prefetch=0,
            grid=grid,
            in_specs=[
                # Averaged weights / bias: tiny, resident in SMEM (scalar reads).
                pl.BlockSpec(memory_space=pltpu.MemorySpace.SMEM),
                pl.BlockSpec(memory_space=pltpu.MemorySpace.SMEM),
                # Input pixel tile: pixels on lanes, full channel extent.
                pl.BlockSpec((1, c_in, tile_p), lambda i, j: (i, 0, j)),
            ],
            out_specs=pl.BlockSpec((1, c_out, tile_p), lambda i, j: (i, 0, j)),
        ),
        compiler_params=pltpu.CompilerParams(
            dimension_semantics=("parallel", "parallel")),
    )(w_avg, b_avg, x3)

    if p_pad != p:
        out3 = out3[:, :, :p]
    return out3.reshape(n, c_out, h, w)


def ensemble_reference(x_nchw, weights, biases):
    """Plain-JAX reference matching the PyTorch forward (per-model sum / M)."""
    n, c_in, h, w = x_nchw.shape
    m, _, c_out = weights.shape
    x = x_nchw.astype(jnp.float32).reshape(n, c_in, h * w)
    result = None
    for i in range(m):
        y = jnp.einsum("ncp,cd->ndp", x, weights[i].astype(jnp.float32))
        y = y + biases[i].astype(jnp.float32)[None, :, None]
        result = y if result is None else result + y
    result = result / m
    return result.reshape(n, c_out, h, w).astype(x_nchw.dtype)


if __name__ == "__main__":
    key = jax.random.PRNGKey(0)
    k_x, k_w, k_b = jax.random.split(key, 3)

    # Small shapes consistent with the module: NCHW input, ensemble of 3
    # single-class (segmentation) 1x1-conv heads.
    N, C_IN, H, W = 2, 4, 16, 16
    M, C_OUT = 3, 1

    x = jax.random.normal(k_x, (N, C_IN, H, W), dtype=jnp.float32)
    weights = jax.random.normal(k_w, (M, C_IN, C_OUT), dtype=jnp.float32) * 0.1
    biases = jax.random.normal(k_b, (M, C_OUT), dtype=jnp.float32) * 0.1

    out = ensemble_forward(x, weights, biases)
    out = jax.block_until_ready(out)

    ref = ensemble_reference(x, weights, biases)
    assert out.shape == (N, C_OUT, H, W)
    assert jnp.allclose(out, ref, atol=1e-5, rtol=1e-5), "mismatch vs reference"

    print("KERNEL_OK")
</pallas_src>

<mosaic_0001>
module attributes {stable_mosaic.version = 11 : i64} {
  func.func @_ensemble_kernel(%arg0: i32, %arg1: i32, %arg2: memref<4xf32, #tpu.memory_space<smem>>, %arg3: memref<1xf32, #tpu.memory_space<smem>>, %arg4: memref<1x4x256xf32, #tpu.memory_space<vmem>>, %arg5: memref<1x1x256xf32, #tpu.memory_space<vmem>>) attributes {dimension_semantics = [#tpu.dimension_semantics<parallel>, #tpu.dimension_semantics<parallel>], iteration_bounds = array<i64: 2, 1>, scalar_prefetch = 0 : i64, scratch_operands = 0 : i64, tpu.core_type = #tpu.core_type<tc>, window_params = [{transform_indices = @transform_0, window_bounds = array<i64: 4>}, {transform_indices = @transform_1, window_bounds = array<i64: 1>}, {transform_indices = @transform_2, window_bounds = array<i64: 1, 4, 256>}, {transform_indices = @transform_3, window_bounds = array<i64: 1, 1, 256>}]} {
    %c0 = arith.constant 0 : index
    %c0_0 = arith.constant 0 : index
    %c0_1 = arith.constant 0 : index
    %0 = vector.load %arg4[%c0, %c0_0, %c0_1] : memref<1x4x256xf32, #tpu.memory_space<vmem>>, vector<1x4x256xf32>
    %1 = vector.shape_cast %0 : vector<1x4x256xf32> to vector<4x256xf32>
    %2 = vector.extract_strided_slice %1 {offsets = [0, 0], sizes = [1, 256], strides = [1, 1]} : vector<4x256xf32> to vector<1x256xf32>
    %c0_2 = arith.constant 0 : index
    %3 = memref.load %arg2[%c0_2] : memref<4xf32, #tpu.memory_space<smem>>
    %4 = vector.broadcast %3 : f32 to vector<1x256xf32>
    %5 = arith.mulf %2, %4 : vector<1x256xf32>
    %6 = vector.extract_strided_slice %1 {offsets = [1, 0], sizes = [1, 256], strides = [1, 1]} : vector<4x256xf32> to vector<1x256xf32>
    %c1 = arith.constant 1 : index
    %7 = memref.load %arg2[%c1] : memref<4xf32, #tpu.memory_space<smem>>
    %8 = vector.broadcast %7 : f32 to vector<1x256xf32>
    %9 = arith.mulf %6, %8 : vector<1x256xf32>
    %10 = arith.addf %5, %9 : vector<1x256xf32>
    %11 = vector.extract_strided_slice %1 {offsets = [2, 0], sizes = [1, 256], strides = [1, 1]} : vector<4x256xf32> to vector<1x256xf32>
    %c2 = arith.constant 2 : index
    %12 = memref.load %arg2[%c2] : memref<4xf32, #tpu.memory_space<smem>>
    %13 = vector.broadcast %12 : f32 to vector<1x256xf32>
    %14 = arith.mulf %11, %13 : vector<1x256xf32>
    %15 = arith.addf %10, %14 : vector<1x256xf32>
    %16 = vector.extract_strided_slice %1 {offsets = [3, 0], sizes = [1, 256], strides = [1, 1]} : vector<4x256xf32> to vector<1x256xf32>
    %c3 = arith.constant 3 : index
    %17 = memref.load %arg2[%c3] : memref<4xf32, #tpu.memory_space<smem>>
    %18 = vector.broadcast %17 : f32 to vector<1x256xf32>
    %19 = arith.mulf %16, %18 : vector<1x256xf32>
    %20 = arith.addf %15, %19 : vector<1x256xf32>
    %c0_3 = arith.constant 0 : index
    %21 = memref.load %arg3[%c0_3] : memref<1xf32, #tpu.memory_space<smem>>
    %22 = vector.broadcast %21 : f32 to vector<1x256xf32>
    %23 = arith.addf %20, %22 : vector<1x256xf32>
    %c0_4 = arith.constant 0 : index
    %c0_5 = arith.constant 0 : index
    %c0_6 = arith.constant 0 : index
    %24 = vector.load %arg5[%c0_4, %c0_5, %c0_6] : memref<1x1x256xf32, #tpu.memory_space<vmem>>, vector<1x1x256xf32>
    %25 = vector.shape_cast %24 : vector<1x1x256xf32> to vector<1x256xf32>
    %26 = vector.shape_cast %23 : vector<1x256xf32> to vector<1x1x256xf32>
    tpu.vector_store %arg5[%c0_4, %c0_5, %c0_6], %26 {strides = array<i32>} : memref<1x1x256xf32, #tpu.memory_space<vmem>>, vector<1x1x256xf32>,
    return
  }
  func.func @transform_0(%arg0: i32, %arg1: i32) -> i32 {
    %c0_i32 = arith.constant 0 : i32
    %c0_i32_0 = arith.constant 0 : i32
    return %c0_i32 : i32
  }
  func.func @transform_1(%arg0: i32, %arg1: i32) -> i32 {
    %c0_i32 = arith.constant 0 : i32
    %c0_i32_0 = arith.constant 0 : i32
    return %c0_i32 : i32
  }
  func.func @transform_2(%arg0: i32, %arg1: i32) -> (i32, i32, i32) {
    %c0_i32 = arith.constant 0 : i32
    %c0_i32_0 = arith.constant 0 : i32
    return %arg0, %c0_i32, %arg1 : i32, i32, i32
  }
  func.func @transform_3(%arg0: i32, %arg1: i32) -> (i32, i32, i32) {
    %c0_i32 = arith.constant 0 : i32
    %c0_i32_0 = arith.constant 0 : i32
    return %arg0, %c0_i32, %arg1 : i32, i32, i32
  }
}

</mosaic_0001>

<llo_original>
// kernel: tpu_custom_call.1
$region0: #{tpu_custom_call.1}
  #allocation0 [shape = 'u32[]', space=smem, size = 0x4, offset = 0x4, fixed_abs, tag = 'smem constant byte address 0x4 - core index']
  #allocation1 [shape = 'u32[144,128]{1,0:T(1,128)}', space=vmem, size = 0x12000, scoped, tag = 'internal scratch']
  #allocation2 [shape = 'f32[1]{0:T(128)S(6)}', space=smem, size = 0x200, scoped, tag = 'scoped memory for tpu_custom_call.1']
  %s0 = inlined_call_operand.vmem [shape: f32[4], index: 0, kind: input, shape index: {}]
  %s1 = inlined_call_operand.<no memory space> [shape: f32[1], index: 1, kind: input, shape index: {}]
  %s2 = inlined_call_operand.hbm [shape: f32[2,4,256], index: 2, kind: input, shape index: {}]
  %s3 = inlined_call_operand.hbm [shape: f32[2,1,256], index: 3, kind: output, shape index: {}]
  %s4 = sld [smem:[#allocation0]]
  $region53: #{tpu_custom_call.1} parent=0
    _
  %s6 = ssub.s32 1, %s4
  %s7 = scalar_select 0, %s6, %s4
  %8 = sst [smem:[#allocation2]] %s1
  $region1: #{tpu_custom_call.1} parent=0
    #allocation3 [shape = 'u8[512]{0}', space=smem, size = 0x200, scoped, tag = 'input window, operand 0, single buffered']
    #allocation4 [shape = 's32[2]{0}', space=sflag, size = 0x8, scoped, tag = 'scoped memory for tpu_custom_call.1']
    #allocation5 [shape = 's32[2]{0}', space=sflag, size = 0x8, scoped, tag = 'scoped memory for tpu_custom_call.1']
    #allocation6 [shape = 's32[2]{0}', space=sflag, size = 0x8, scoped, tag = 'scoped memory for tpu_custom_call.1']
    #allocation7 [shape = 'u8[8192]{0}', space=vmem, size = 0x2000, scoped, tag = 'input window, operand 2']
    #allocation8 [shape = 'u8[2048]{0}', space=vmem, size = 0x800, scoped, tag = 'output window, operand 0']
    %9 = vsyncpa [#allocation6], 0
    %10 = vsyncpa [#allocation4], 0
    %s11 = scalar_lea.sflag [#allocation4], 1
    %12 = vsyncpa %s11, 0
    %13 = vsyncpa [#allocation5], 0
    %s14 = scalar_lea.sflag [#allocation5], 1
    %15 = vsyncpa %s14, 0
    loop: start=0, step=1, limit=4
    $region2: #{tpu_custom_call.1} parent=1 // loop_pre_header
      _
    $region3: #{tpu_custom_call.1} parent=1 // loop_header
      %s17 = sphi 0, %s21
      %p18 = scmp.ge.s32.totalorder %s17, 4
      %s24 = sphi 0, %s36
      %s25 = sphi 0, %s32
      %s26 = sphi 0, %s24
      %s27 = sphi 0, %s25
      %s28 = sphi 0, %s26
      %s29 = sphi 0, %s27
      %s37 = sphi 0, %s37
      %s39 = sphi 0, %s37
      %s40 = sphi 0, %s39
      %s54 = sphi 0, %s40
      %s58 = sphi 0, %s58
      %s60 = sphi 0, %s58
      %s61 = sphi 0, %s60
      %s75 = sphi 0, %s61
      %s83 = sphi 0, %s85
      %s86 = sphi 0, %s83
      %s87 = sphi 0, %s86
      %s103 = sphi 0, %s87
      %s111 = sphi 0, %s113
      %s114 = sphi 0, %s111
      %s115 = sphi 0, %s114
      %s131 = sphi 0, %s115
    $region4: #{tpu_custom_call.1} parent=1 // loop_header_branch
      %20 = sbr.rel (%p18) target = $region8
    $region5: #{tpu_custom_call.1} parent=1 // loop_body
      %s22 = ssub.s32 %s17, 1
      %s23 = ssub.s32 %s17, 2
      %s30 = sadd.s32 1, %s25
      %p31 = scmp.ge.s32.totalorder %s30, 1
      %s32 = scalar_select %p31, 0, %s30
      %s33 = sadd.s32 1, %s24
      %s34 = scalar_select %p31, %s33, %s24
      %p35 = scmp.ge.s32.totalorder %s34, 2
      %s36 = scalar_select %p35, 0, %s34
      %s38 = sadd.s32 %s37, 1
      %p41 = scmp.eq.s32.totalorder %s17, 1
      %p42 = scmp.ne.s32.totalorder %s37, %s39
      %p43 = scmp.eq.s32.totalorder %s17, 0
      %p44 = por %p42, %p43
      %p45 = scmp.ne.s32.totalorder %s37, %s39
      %p46 = scmp.eq.s32.totalorder %s22, 1
      %p47 = por %p45, %p46
      %p48 = scmp.ne.s32.totalorder %s39, %s40
      %p49 = scmp.eq.s32.totalorder %s22, 0
      %p50 = por %p48, %p49
      %p51 = scmp.ne.s32.totalorder %s39, %s40
      %p52 = scmp.eq.s32.totalorder %s23, 1
      %p53 = por %p51, %p52
      %p55 = scmp.ne.s32.totalorder %s40, %s54
      %p56 = scmp.eq.s32.totalorder %s23, 0
      %p57 = por %p55, %p56
      %s59 = sadd.s32 %s58, 1
      %p62 = scmp.eq.s32.totalorder %s17, 1
      %p63 = scmp.ne.s32.totalorder %s58, %s60
      %p64 = scmp.eq.s32.totalorder %s17, 0
      %p65 = por %p63, %p64
      %p66 = scmp.ne.s32.totalorder %s58, %s60
      %p67 = scmp.eq.s32.totalorder %s22, 1
      %p68 = por %p66, %p67
      %p69 = scmp.ne.s32.totalorder %s60, %s61
      %p70 = scmp.eq.s32.totalorder %s22, 0
      %p71 = por %p69, %p70
      %p72 = scmp.ne.s32.totalorder %s60, %s61
      %p73 = scmp.eq.s32.totalorder %s23, 1
      %p74 = por %p72, %p73
      %p76 = scmp.ne.s32.totalorder %s61, %s75
      %p77 = scmp.eq.s32.totalorder %s23, 0
      %p78 = por %p76, %p77
      %s79 = ssub.s32 %s24, %s36
      %s80 = ssub.s32 %s25, %s32
      %s81 = sor.u32 %s79, %s80
      %p82 = scmp.eq.s32.totalorder %s81, 0
      %s84 = sadd.s32 %s83, 1
      %s85 = scalar_select %p82, %s83, %s84
      %p88 = pneg %p82
      %p89 = scmp.eq.s32.totalorder %s17, 1
      %p90 = por %p88, %p89
      %p91 = scmp.ne.s32.totalorder %s83, %s86
      %p92 = scmp.eq.s32.totalorder %s17, 0
      %p93 = por %p91, %p92
      %p94 = scmp.ne.s32.totalorder %s83, %s86
      %p95 = scmp.eq.s32.totalorder %s22, 1
      %p96 = por %p94, %p95
      %p97 = scmp.ne.s32.totalorder %s86, %s87
      %p98 = scmp.eq.s32.totalorder %s22, 0
      %p99 = por %p97, %p98
      %p100 = scmp.ne.s32.totalorder %s86, %s87
      %p101 = scmp.eq.s32.totalorder %s23, 1
      %p102 = por %p100, %p101
      %p104 = scmp.ne.s32.totalorder %s87, %s103
      %p105 = scmp.eq.s32.totalorder %s23, 0
      %p106 = por %p104, %p105
      %s107 = ssub.s32 %s24, %s36
      %s108 = ssub.s32 %s25, %s32
      %s109 = sor.u32 %s107, %s108
      %p110 = scmp.eq.s32.totalorder %s109, 0
      %s112 = sadd.s32 %s111, 1
      %s113 = scalar_select %p110, %s111, %s112
      %p116 = pneg %p110
      %p117 = scmp.eq.s32.totalorder %s17, 1
      %p118 = por %p116, %p117
      %p119 = scmp.ne.s32.totalorder %s111, %s114
      %p120 = scmp.eq.s32.totalorder %s17, 0
      %p121 = por %p119, %p120
      %p122 = scmp.ne.s32.totalorder %s111, %s114
      %p123 = scmp.eq.s32.totalorder %s22, 1
      %p124 = por %p122, %p123
      %p125 = scmp.ne.s32.totalorder %s114, %s115
      %p126 = scmp.eq.s32.totalorder %s22, 0
      %p127 = por %p125, %p126
      %p128 = scmp.ne.s32.totalorder %s114, %s115
      %p129 = scmp.eq.s32.totalorder %s23, 1
      %p130 = por %p128, %p129
      %p132 = scmp.ne.s32.totalorder %s115, %s131
      %p133 = scmp.eq.s32.totalorder %s23, 0
      %p134 = por %p132, %p133
      %p135 = scmp.le.s32.totalorder 1, %s17
      %p136 = scmp.lt.s32.totalorder %s17, 3
      %p137 = pnand %p135, %p136
      %p138 = pneg %p137
      // Predicated region
      $region9: #{tpu_custom_call.1} parent=5 // pred_check
        _
      $region10: #{tpu_custom_call.1} parent=5 // pred_check_branch
        %140 = sbr.rel (%p137) target = $region12
      $region11: #{tpu_custom_call.1} parent=5 // pred_region
        %s141 = ssub.s32 %s17, 1
        // Predicated region
        $region13: #{tpu_custom_call.1} parent=11 // pred_check
          %p142 = pneg %p50
        $region14: #{tpu_custom_call.1} parent=11 // pred_check_branch
          %144 = sbr.rel (%p142) target = $region16
        $region15: #{tpu_custom_call.1} parent=11 // pred_region
          %s146 = ssub.s32 16, 16
          %147 = vsyncadd [#allocation6], %s146
          %s149 = sshll.u32 %s0, 4
          %s150 = int_to_ptr.vmem [resolvable:$true] %s149
          %152 = dma.vmem_to_smem %s150, 16, [#allocation3], [#allocation6]
        $region16: #{tpu_custom_call.1} parent=11 // pred_fallthru
          _
        // Predicated region
        $region17: #{tpu_custom_call.1} parent=11 // pred_check
          %p153 = pneg %p71
        $region18: #{tpu_custom_call.1} parent=11 // pred_check_branch
          %155 = sbr.rel (%p153) target = $region20
        $region19: #{tpu_custom_call.1} parent=11 // pred_region
          _
        $region20: #{tpu_custom_call.1} parent=11 // pred_fallthru
          _
      $region12: #{tpu_custom_call.1} parent=5 // pred_fallthru
        _
      %p156 = scmp.lt.s32.totalorder %s17, 2
      // Predicated region
      $region21: #{tpu_custom_call.1} parent=5 // pred_check
        %p157 = pneg %p156
      $region22: #{tpu_custom_call.1} parent=5 // pred_check_branch
        %159 = sbr.rel (%p157) target = $region24
      $region23: #{tpu_custom_call.1} parent=5 // pred_region
        // Predicated region
        $region25: #{tpu_custom_call.1} parent=23 // pred_check
          %p160 = pneg %p93
        $region26: #{tpu_custom_call.1} parent=23 // pred_check_branch
          %162 = sbr.rel (%p160) target = $region28
        $region27: #{tpu_custom_call.1} parent=23 // pred_region
          %s163 = sand.u32 %s83, 1
          %s164 = scalar_lea.sflag [#allocation4], %s163
          %s165 = sand.u32 %s83, 1
          %s166 = smul.addr %s165, 8
          %s167 = scalar_lea.vmem [#allocation7], %s166
          %s168 = smul.u32 2, %s25
          %s170 = ssub.s32 128, 128
          %171 = vsyncadd %s164, %s170
          %s172 = smul.addr %s24, 2
          %s173 = sadd.s32 %s168, %s172
          %s174 = smul.addr %s173, 64
          %s175 = scalar_lea.hbm %s2, %s174
          %s177 = sshll.u32 %s167, 4
          %s178 = int_to_ptr.vmem [resolvable:$true] %s177
          %180 = dma.hbm_to_vmem [thread:$0]  %s175, 128, %s178, %s164
        $region28: #{tpu_custom_call.1} parent=23 // pred_fallthru
          _
      $region24: #{tpu_custom_call.1} parent=5 // pred_fallthru
        _
      %p181 = scmp.le.s32.totalorder 1, %s17
      %p182 = scmp.lt.s32.totalorder %s17, 3
      %p183 = pnand %p181, %p182
      %p184 = pneg %p183
      // Predicated region
      $region29: #{tpu_custom_call.1} parent=5 // pred_check
        _
      $region30: #{tpu_custom_call.1} parent=5 // pred_check_branch
        %186 = sbr.rel (%p183) target = $region32
      $region31: #{tpu_custom_call.1} parent=5 // pred_region
        %s187 = ssub.s32 %s17, 1
        // Predicated region
        $region33: #{tpu_custom_call.1} parent=31 // pred_check
          %p188 = pneg %p50
        $region34: #{tpu_custom_call.1} parent=31 // pred_check_branch
          %190 = sbr.rel (%p188) target = $region36
        $region35: #{tpu_custom_call.1} parent=31 // pred_region
          %191 = dma.done [#allocation6], 16
        $region36: #{tpu_custom_call.1} parent=31 // pred_fallthru
          _
        %s192 = sand.u32 %s86, 1
        %s193 = scalar_lea.sflag [#allocation4], %s192
        %s194 = sand.u32 %s86, 1
        %s195 = smul.addr %s194, 8
        %s196 = scalar_lea.vmem [#allocation7], %s195
        // Predicated region
        $region37: #{tpu_custom_call.1} parent=31 // pred_check
          %p197 = pneg %p99
        $region38: #{tpu_custom_call.1} parent=31 // pred_check_branch
          %199 = sbr.rel (%p197) target = $region40
        $region39: #{tpu_custom_call.1} parent=31 // pred_region
          %200 = dma.done %s193, 128
        $region40: #{tpu_custom_call.1} parent=31 // pred_fallthru
          _
        %201 = sfence
        %p202 = pneg %p50
        %p203 = pneg %p47
        %p204 = pneg %p71
        %p205 = pneg %p68
        %s206 = sand.u32 %s86, 1
        %s207 = scalar_lea.sflag [#allocation4], %s206
        %s208 = sand.u32 %s86, 1
        %s209 = smul.addr %s208, 8
        %s210 = scalar_lea.vmem [#allocation7], %s209
        %p211 = pneg %p99
        %p212 = pneg %p96
        %p213 = pneg %p127
        %p214 = pneg %p124
        %s215 = sand.u32 %s114, 1
        %s216 = scalar_lea.sflag [#allocation5], %s215
        %s217 = sand.u32 %s114, 1
        %s218 = smul.addr %s217, 2
        %s219 = scalar_lea.vmem [#allocation8], %s218
        %s220 = smul.u32 2, %s27
        %s221 = smul.u32 2, %s27
        %v222 = vld [vmem:[%s196] sm:$0xff]
        %s223 = sld [smem:[#allocation3]]
        %v224 = vstv %s223
        %v225 = vmul.f32 %v222, %v224
        %s226 = sld [smem:[#allocation3 + $0x1]]
        %v227 = vstv %s226
        %v228 = vmul.f32 %v222, %v227
        %v230 = vrot.slane %v228, 5
        %v231 = vrot.slane %v230, 4
        %v233 = vadd.f32 %v225, %v231
        %s234 = sld [smem:[#allocation3 + $0x2]]
        %v235 = vstv %s234
        %v236 = vmul.f32 %v222, %v235
        %v238 = vrot.slane %v236, 6
        %v239 = vrot.slane %v238, 4
        %v241 = vadd.f32 %v233, %v239
        %s242 = sld [smem:[#allocation3 + $0x3]]
        %v243 = vstv %s242
        %v244 = vmul.f32 %v222, %v243
        %v246 = vrot.slane %v244, 7
        %v247 = vrot.slane %v246, 4
        %v249 = vadd.f32 %v241, %v247
        %s250 = sld [smem:[#allocation2]]
        %v251 = vstv %s250
        %v252 = vadd.f32 %v249, %v251
        %v255 = vunpack.c.l.s4 1966171168
        %v256 = vunpack.c.0.s8 %v255
        %v257 = vlaneseq
        %v258 = vshrl.u32 %v257, 7
        %v259 = vsub.s32 %v256, %v258
        %v260 = vrot.slane %v252, %v259
        %v262 = vunpack.c.l.s4 1966171168
        %v263 = vunpack.c.0.s8 %v262
        %v264 = vlaneseq
        %v265 = vshrl.u32 %v264, 7
        %v266 = vsub.s32 %v263, %v265
        %v267 = vrot.slane %v260, %v266
        %v269 = vlaneseq
        %vm270 = vcmp.ge.s32.totalorder %v269, 0
        %vm271 = vcmp.lt.s32.totalorder %v269, 256
        %vm272 = vmand %vm270, %vm271
        %273 = vst.msk [vmem:[%s219] sm:$0x3] %vm272, %v267
        %s274 = sand.u32 %s114, 1
        %s275 = scalar_lea.sflag [#allocation5], %s274
        %s276 = sand.u32 %s114, 1
        %s277 = smul.addr %s276, 2
        %s278 = scalar_lea.vmem [#allocation8], %s277
        // Predicated region
        $region41: #{tpu_custom_call.1} parent=31 // pred_check
          %p279 = pneg %p124
        $region42: #{tpu_custom_call.1} parent=31 // pred_check_branch
          %281 = sbr.rel (%p279) target = $region44
        $region43: #{tpu_custom_call.1} parent=31 // pred_region
          %s282 = smul.u32 2, %s27
          %s284 = ssub.s32 32, 32
          %285 = vsyncadd %s275, %s284
          %s286 = smul.addr %s26, 2
          %s287 = sadd.s32 %s282, %s286
          %s288 = smul.addr %s287, 16
          %s289 = scalar_lea.hbm %s3, %s288
          %s291 = sshll.u32 %s278, 4
          %s292 = int_to_ptr.vmem [resolvable:$true] %s291
          %294 = dma.vmem_to_hbm [thread:$0]  %s292, 32, %s289, %s275
        $region44: #{tpu_custom_call.1} parent=31 // pred_fallthru
          _
      $region32: #{tpu_custom_call.1} parent=5 // pred_fallthru
        _
      %p295 = scmp.le.s32.totalorder 2, %s17
      // Predicated region
      $region45: #{tpu_custom_call.1} parent=5 // pred_check
        %p296 = pneg %p295
      $region46: #{tpu_custom_call.1} parent=5 // pred_check_branch
        %298 = sbr.rel (%p296) target = $region48
      $region47: #{tpu_custom_call.1} parent=5 // pred_region
        %s299 = ssub.s32 %s17, 2
        // Predicated region
        $region49: #{tpu_custom_call.1} parent=47 // pred_check
          %p300 = pneg %p130
        $region50: #{tpu_custom_call.1} parent=47 // pred_check_branch
          %302 = sbr.rel (%p300) target = $region52
        $region51: #{tpu_custom_call.1} parent=47 // pred_region
          %s303 = sand.u32 %s115, 1
          %s304 = scalar_lea.sflag [#allocation5], %s303
          %s305 = sand.u32 %s115, 1
          %s306 = smul.addr %s305, 2
          %s307 = scalar_lea.vmem [#allocation8], %s306
          %308 = dma.done %s304, 32
        $region52: #{tpu_custom_call.1} parent=47 // pred_fallthru
          _
      $region48: #{tpu_custom_call.1} parent=5 // pred_fallthru
        _
    $region6: #{tpu_custom_call.1} parent=1 // loop_footer
      %s21 = sadd.s32 1, %s17
    $region7: #{tpu_custom_call.1} parent=1 // loop_footer_branch
      %16 = sbr.rel target = $region3
    $region8: #{tpu_custom_call.1} parent=1 // loop_exit
      _
    %309 = vsyncpa [#allocation4], 1
    %s310 = scalar_lea.sflag [#allocation4], 1
    %311 = vsyncpa %s310, 1
    %312 = vsyncpa [#allocation5], 1
    %s313 = scalar_lea.sflag [#allocation5], 1
    %314 = vsyncpa %s313, 1
    %315 = vsyncpa [#allocation6], 1
    %s316 = scalar_lea.sflag [#allocation6], 1
    %317 = vsyncpa %s316, 1

</llo_original>
